<compile_context>
chip_gen: v5e
topology: v5e:2x2
jax: 0.10.0
libtpu: 0.0.40
codegen_flags: <defaults>
</compile_context>

<pallas_src>
import jax
import jax.numpy as jnp
from jax.experimental import pallas as pl
from jax.experimental.pallas import tpu as pltpu


def _round_up(x, m):
    return (x + m - 1) // m * m


# ---------------------------------------------------------------------------
# Kernel
# ---------------------------------------------------------------------------
def usad_kernel(g_ref,
                we1, be1, we2, be2, we3, be3,          # encoder
                w11, b11, w12, b12, w13, b13,          # decoder1
                w21, b21, w22, b22, w23, b23,          # decoder2
                ae1_ref, ae2_ref, ae2ae1_ref):
    # Load every weight / bias exactly once (encoder and decoder2 are reused;
    # JAX does not CSE broadcast_in_dim, so hoist loads out of the reuse).
    We1, We2, We3 = we1[...], we2[...], we3[...]
    Be1, Be2, Be3 = be1[...], be2[...], be3[...]
    W11, W12, W13 = w11[...], w12[...], w13[...]
    B11, B12, B13 = b11[...], b12[...], b13[...]
    W21, W22, W23 = w21[...], w22[...], w23[...]
    B21, B22, B23 = b21[...], b22[...], b23[...]

    def lin(x, w, b):
        return jnp.dot(x, w, preferred_element_type=jnp.float32) + b

    def encoder(x):
        h = jnp.maximum(lin(x, We1, Be1), 0.0)
        h = jnp.maximum(lin(h, We2, Be2), 0.0)
        return jnp.maximum(lin(h, We3, Be3), 0.0)

    def decoder(z, w1, b1, w2, b2, w3, b3):
        h = jnp.maximum(lin(z, w1, b1), 0.0)
        h = jnp.maximum(lin(h, w2, b2), 0.0)
        return jax.nn.sigmoid(lin(h, w3, b3))

    g = g_ref[...].astype(jnp.float32)

    z = encoder(g)
    ae1 = decoder(z, W11, B11, W12, B12, W13, B13)
    ae1_ref[...] = ae1.astype(ae1_ref.dtype)
    ae2_ref[...] = decoder(z, W21, B21, W22, B22, W23, B23).astype(ae2_ref.dtype)
    z2 = encoder(ae1)
    ae2ae1_ref[...] = decoder(z2, W21, B21, W22, B22, W23, B23).astype(ae2ae1_ref.dtype)
    # TODO(synk): `self.forward_n += 1` is training-only Python-side state, not
    # part of the numerical forward pass; omitted.


# ---------------------------------------------------------------------------
# Params
# ---------------------------------------------------------------------------
def init_usad_params(key, n_feats, n_window, n_hidden=16, n_latent=5):
    """Deterministic init mimicking nn.Linear default U(-1/sqrt(fan_in), ...)."""
    n = n_feats * n_window
    dims = {
        # encoder
        "we1": (n, n_hidden), "we2": (n_hidden, n_hidden), "we3": (n_hidden, n_latent),
        # decoder1
        "w11": (n_latent, n_hidden), "w12": (n_hidden, n_hidden), "w13": (n_hidden, n),
        # decoder2
        "w21": (n_latent, n_hidden), "w22": (n_hidden, n_hidden), "w23": (n_hidden, n),
    }
    params = {}
    keys = jax.random.split(key, 2 * len(dims))
    for i, (name, (fan_in, fan_out)) in enumerate(dims.items()):
        bound = 1.0 / (fan_in ** 0.5)
        params[name] = jax.random.uniform(
            keys[2 * i], (fan_in, fan_out), jnp.float32, -bound, bound)
        params["b" + name[1:]] = jax.random.uniform(
            keys[2 * i + 1], (1, fan_out), jnp.float32, -bound, bound)
    return params


def _pad_latent(params, n_latent):
    """Zero-pad the latent dim to a sublane multiple.  Exact: padded we3
    columns / be3 entries are zero so padded latents are ReLU(0)=0, and the
    padded w11/w21 rows multiply those zero latents."""
    lat_pad = _round_up(n_latent, 8)
    dl = lat_pad - n_latent
    if dl == 0:
        return params
    p = dict(params)
    p["we3"] = jnp.pad(params["we3"], ((0, 0), (0, dl)))
    p["be3"] = jnp.pad(params["be3"], ((0, 0), (0, dl)))
    p["w11"] = jnp.pad(params["w11"], ((0, dl), (0, 0)))
    p["w21"] = jnp.pad(params["w21"], ((0, dl), (0, 0)))
    return p


# ---------------------------------------------------------------------------
# Tiling / VMEM budget
# ---------------------------------------------------------------------------
def _vmem_limit_bytes():
    """Generation-aware scoped-VMEM limit: ~75% of physical per-core VMEM
    (v5e/v6e: 128 MiB -> 96 MiB, v7x: 64 MiB -> 48 MiB)."""
    try:
        cap = int(pltpu.get_tpu_info().vmem_capacity_bytes)
    except Exception:
        cap = 64 * 1024 * 1024            # conservative fallback (v7x per-core)
    return max(min(cap * 3 // 4, 96 * 1024 * 1024), 32 * 1024 * 1024)


def _pick_tile(B, n, in_bytes, out_bytes, vmem_limit):
    """Batch tile TB (rows per grid step).

    Per-row VMEM ~= n_lane * (2*(in + 3*out)   # 4 streamed arrays, double-buffered
                              + 6*4)           # f32 in-kernel intermediates
    Budget = vmem_limit - resident weights (double-buffered) - headroom.
    Target TB in [256, 1024]; for large batches guarantee >=2 grid steps so
    dimension_semantics=("parallel",) keeps both v7x TensorCores busy.
    """
    sub = max(32 // in_bytes, 32 // out_bytes)          # sublane quantum (8 f32 / 16 bf16)
    n_lane = _round_up(n, 128)
    row_bytes = n_lane * (2 * (in_bytes + 3 * out_bytes) + 6 * 4)
    resident = 2 * (_round_up(n, 8) * 128 * 4           # we1 (n,16), lane-padded
                    + 2 * 16 * n_lane * 4               # w13, w23 (16,n)
                    + 64 * 1024)                        # small weights / biases
    budget = max(vmem_limit - resident - 2 * 1024 * 1024, 1024 * 1024)
    tb = budget // max(row_bytes, 1)
    tb = max(sub, min(1024, (tb // sub) * sub))
    if B <= tb:
        half = _round_up((B + 1) // 2, sub)
        if 256 <= half <= tb:
            return half                                  # 2 grid steps (megacore)
        return B                                         # single full-batch block (always legal)
    return tb


# ---------------------------------------------------------------------------
# Wrapper
# ---------------------------------------------------------------------------
def usad_forward(g, params, out_dtype=jnp.bfloat16):
    """USAD forward.  All internal math is f32; `out_dtype` only controls the
    dtype the three reconstructions are streamed back to HBM in (bf16 halves
    the dominant HBM traffic; pass jnp.float32 for exact f32 outputs)."""
    g_shape = g.shape
    B = g_shape[0]
    n = 1
    for d in g_shape[1:]:
        n *= d

    g_flat = g.reshape(B, n)                             # row-major reshape: free
    pp = _pad_latent(params, params["we3"].shape[1])

    in_bytes = g_flat.dtype.itemsize
    out_bytes = jnp.dtype(out_dtype).itemsize
    vmem_limit = _vmem_limit_bytes()
    TB = _pick_tile(B, n, in_bytes, out_bytes, vmem_limit)

    names = ["we1", "be1", "we2", "be2", "we3", "be3",
             "w11", "b11", "w12", "b12", "w13", "b13",
             "w21", "b21", "w22", "b22", "w23", "b23"]

    stream_spec = pl.BlockSpec((TB, n), lambda i: (i, 0))
    weight_specs = [pl.BlockSpec(pp[k].shape, lambda i: (0, 0)) for k in names]
    out_sds = jax.ShapeDtypeStruct((B, n), out_dtype)

    ae1, ae2, ae2ae1 = pl.pallas_call(
        usad_kernel,
        out_shape=(out_sds, out_sds, out_sds),
        grid=(pl.cdiv(B, TB),),
        in_specs=[stream_spec] + weight_specs,
        out_specs=(stream_spec, stream_spec, stream_spec),
        compiler_params=pltpu.CompilerParams(
            dimension_semantics=("parallel",),
            vmem_limit_bytes=int(vmem_limit)),
    )(g_flat, *[pp[k] for k in names])

    return ae1.reshape(g_shape), ae2.reshape(g_shape), ae2ae1.reshape(g_shape)


if __name__ == "__main__":
    # Small shapes consistent with USAD: batch=2, n_window=8, feats=4 -> n=32.
    feats, n_window, batch = 4, 8, 2
    key = jax.random.PRNGKey(0)
    k_in, k_param = jax.random.split(key)

    g = jax.random.uniform(k_in, (batch, n_window, feats), jnp.float32)
    params = init_usad_params(k_param, feats, n_window)

    ae1, ae2, ae2ae1 = usad_forward(g, params)
    jax.block_until_ready((ae1, ae2, ae2ae1))

    assert ae1.shape == g.shape and ae2.shape == g.shape and ae2ae1.shape == g.shape
    assert bool(jnp.isfinite(ae1.astype(jnp.float32)).all()
                & jnp.isfinite(ae2.astype(jnp.float32)).all()
                & jnp.isfinite(ae2ae1.astype(jnp.float32)).all())
    print("KERNEL_OK")
</pallas_src>

<mosaic_0001>
module attributes {stable_mosaic.version = 11 : i64} {
  func.func @usad_kernel(%arg0: i32, %arg1: memref<2x32xf32, #tpu.memory_space<vmem>>, %arg2: memref<32x16xf32, #tpu.memory_space<vmem>>, %arg3: memref<1x16xf32, #tpu.memory_space<vmem>>, %arg4: memref<16x16xf32, #tpu.memory_space<vmem>>, %arg5: memref<1x16xf32, #tpu.memory_space<vmem>>, %arg6: memref<16x8xf32, #tpu.memory_space<vmem>>, %arg7: memref<1x8xf32, #tpu.memory_space<vmem>>, %arg8: memref<8x16xf32, #tpu.memory_space<vmem>>, %arg9: memref<1x16xf32, #tpu.memory_space<vmem>>, %arg10: memref<16x16xf32, #tpu.memory_space<vmem>>, %arg11: memref<1x16xf32, #tpu.memory_space<vmem>>, %arg12: memref<16x32xf32, #tpu.memory_space<vmem>>, %arg13: memref<1x32xf32, #tpu.memory_space<vmem>>, %arg14: memref<8x16xf32, #tpu.memory_space<vmem>>, %arg15: memref<1x16xf32, #tpu.memory_space<vmem>>, %arg16: memref<16x16xf32, #tpu.memory_space<vmem>>, %arg17: memref<1x16xf32, #tpu.memory_space<vmem>>, %arg18: memref<16x32xf32, #tpu.memory_space<vmem>>, %arg19: memref<1x32xf32, #tpu.memory_space<vmem>>, %arg20: memref<2x32xbf16, #tpu.memory_space<vmem>>, %arg21: memref<2x32xbf16, #tpu.memory_space<vmem>>, %arg22: memref<2x32xbf16, #tpu.memory_space<vmem>>) attributes {dimension_semantics = [#tpu.dimension_semantics<parallel>], iteration_bounds = array<i64: 1>, scalar_prefetch = 0 : i64, scratch_operands = 0 : i64, tpu.core_type = #tpu.core_type<tc>, window_params = [{transform_indices = @transform_0, window_bounds = array<i64: 2, 32>}, {pipeline_mode = #tpu.pipeline_mode<synchronous>, transform_indices = @transform_1, window_bounds = array<i64: 32, 16>}, {pipeline_mode = #tpu.pipeline_mode<synchronous>, transform_indices = @transform_2, window_bounds = array<i64: 1, 16>}, {pipeline_mode = #tpu.pipeline_mode<synchronous>, transform_indices = @transform_3, window_bounds = array<i64: 16, 16>}, {pipeline_mode = #tpu.pipeline_mode<synchronous>, transform_indices = @transform_4, window_bounds = array<i64: 1, 16>}, {pipeline_mode = #tpu.pipeline_mode<synchronous>, transform_indices = @transform_5, window_bounds = array<i64: 16, 8>}, {pipeline_mode = #tpu.pipeline_mode<synchronous>, transform_indices = @transform_6, window_bounds = array<i64: 1, 8>}, {pipeline_mode = #tpu.pipeline_mode<synchronous>, transform_indices = @transform_7, window_bounds = array<i64: 8, 16>}, {pipeline_mode = #tpu.pipeline_mode<synchronous>, transform_indices = @transform_8, window_bounds = array<i64: 1, 16>}, {pipeline_mode = #tpu.pipeline_mode<synchronous>, transform_indices = @transform_9, window_bounds = array<i64: 16, 16>}, {pipeline_mode = #tpu.pipeline_mode<synchronous>, transform_indices = @transform_10, window_bounds = array<i64: 1, 16>}, {pipeline_mode = #tpu.pipeline_mode<synchronous>, transform_indices = @transform_11, window_bounds = array<i64: 16, 32>}, {pipeline_mode = #tpu.pipeline_mode<synchronous>, transform_indices = @transform_12, window_bounds = array<i64: 1, 32>}, {pipeline_mode = #tpu.pipeline_mode<synchronous>, transform_indices = @transform_13, window_bounds = array<i64: 8, 16>}, {pipeline_mode = #tpu.pipeline_mode<synchronous>, transform_indices = @transform_14, window_bounds = array<i64: 1, 16>}, {pipeline_mode = #tpu.pipeline_mode<synchronous>, transform_indices = @transform_15, window_bounds = array<i64: 16, 16>}, {pipeline_mode = #tpu.pipeline_mode<synchronous>, transform_indices = @transform_16, window_bounds = array<i64: 1, 16>}, {pipeline_mode = #tpu.pipeline_mode<synchronous>, transform_indices = @transform_17, window_bounds = array<i64: 16, 32>}, {pipeline_mode = #tpu.pipeline_mode<synchronous>, transform_indices = @transform_18, window_bounds = array<i64: 1, 32>}, {transform_indices = @transform_19, window_bounds = array<i64: 2, 32>}, {transform_indices = @transform_20, window_bounds = array<i64: 2, 32>}, {transform_indices = @transform_21, window_bounds = array<i64: 2, 32>}]} {
    %c0 = arith.constant 0 : index
    %c0_0 = arith.constant 0 : index
    %0 = vector.load %arg2[%c0, %c0_0] : memref<32x16xf32, #tpu.memory_space<vmem>>, vector<32x16xf32>
    %c0_1 = arith.constant 0 : index
    %c0_2 = arith.constant 0 : index
    %1 = vector.load %arg4[%c0_1, %c0_2] : memref<16x16xf32, #tpu.memory_space<vmem>>, vector<16x16xf32>
    %c0_3 = arith.constant 0 : index
    %c0_4 = arith.constant 0 : index
    %2 = vector.load %arg6[%c0_3, %c0_4] : memref<16x8xf32, #tpu.memory_space<vmem>>, vector<16x8xf32>
    %c0_5 = arith.constant 0 : index
    %c0_6 = arith.constant 0 : index
    %3 = vector.load %arg3[%c0_5, %c0_6] : memref<1x16xf32, #tpu.memory_space<vmem>>, vector<1x16xf32>
    %c0_7 = arith.constant 0 : index
    %c0_8 = arith.constant 0 : index
    %4 = vector.load %arg5[%c0_7, %c0_8] : memref<1x16xf32, #tpu.memory_space<vmem>>, vector<1x16xf32>
    %c0_9 = arith.constant 0 : index
    %c0_10 = arith.constant 0 : index
    %5 = vector.load %arg7[%c0_9, %c0_10] : memref<1x8xf32, #tpu.memory_space<vmem>>, vector<1x8xf32>
    %c0_11 = arith.constant 0 : index
    %c0_12 = arith.constant 0 : index
    %6 = vector.load %arg8[%c0_11, %c0_12] : memref<8x16xf32, #tpu.memory_space<vmem>>, vector<8x16xf32>
    %c0_13 = arith.constant 0 : index
    %c0_14 = arith.constant 0 : index
    %7 = vector.load %arg10[%c0_13, %c0_14] : memref<16x16xf32, #tpu.memory_space<vmem>>, vector<16x16xf32>
    %c0_15 = arith.constant 0 : index
    %c0_16 = arith.constant 0 : index
    %8 = vector.load %arg12[%c0_15, %c0_16] : memref<16x32xf32, #tpu.memory_space<vmem>>, vector<16x32xf32>
    %c0_17 = arith.constant 0 : index
    %c0_18 = arith.constant 0 : index
    %9 = vector.load %arg9[%c0_17, %c0_18] : memref<1x16xf32, #tpu.memory_space<vmem>>, vector<1x16xf32>
    %c0_19 = arith.constant 0 : index
    %c0_20 = arith.constant 0 : index
    %10 = vector.load %arg11[%c0_19, %c0_20] : memref<1x16xf32, #tpu.memory_space<vmem>>, vector<1x16xf32>
    %c0_21 = arith.constant 0 : index
    %c0_22 = arith.constant 0 : index
    %11 = vector.load %arg13[%c0_21, %c0_22] : memref<1x32xf32, #tpu.memory_space<vmem>>, vector<1x32xf32>
    %c0_23 = arith.constant 0 : index
    %c0_24 = arith.constant 0 : index
    %12 = vector.load %arg14[%c0_23, %c0_24] : memref<8x16xf32, #tpu.memory_space<vmem>>, vector<8x16xf32>
    %c0_25 = arith.constant 0 : index
    %c0_26 = arith.constant 0 : index
    %13 = vector.load %arg16[%c0_25, %c0_26] : memref<16x16xf32, #tpu.memory_space<vmem>>, vector<16x16xf32>
    %c0_27 = arith.constant 0 : index
    %c0_28 = arith.constant 0 : index
    %14 = vector.load %arg18[%c0_27, %c0_28] : memref<16x32xf32, #tpu.memory_space<vmem>>, vector<16x32xf32>
    %c0_29 = arith.constant 0 : index
    %c0_30 = arith.constant 0 : index
    %15 = vector.load %arg15[%c0_29, %c0_30] : memref<1x16xf32, #tpu.memory_space<vmem>>, vector<1x16xf32>
    %c0_31 = arith.constant 0 : index
    %c0_32 = arith.constant 0 : index
    %16 = vector.load %arg17[%c0_31, %c0_32] : memref<1x16xf32, #tpu.memory_space<vmem>>, vector<1x16xf32>
    %c0_33 = arith.constant 0 : index
    %c0_34 = arith.constant 0 : index
    %17 = vector.load %arg19[%c0_33, %c0_34] : memref<1x32xf32, #tpu.memory_space<vmem>>, vector<1x32xf32>
    %c0_35 = arith.constant 0 : index
    %c0_36 = arith.constant 0 : index
    %18 = vector.load %arg1[%c0_35, %c0_36] : memref<2x32xf32, #tpu.memory_space<vmem>>, vector<2x32xf32>
    %cst = arith.constant dense<0.000000e+00> : vector<2x16xf32>
    %19 = tpu.matmul %18, %0, %cst {dimension_numbers = #tpu.dot_dimension_numbers<[1], [0], [0], [1], [0, 0, 1, 1], [], []>} : vector<2x32xf32>, vector<32x16xf32>, vector<2x16xf32> -> vector<2x16xf32>
    %20 = vector.broadcast %3 : vector<1x16xf32> to vector<2x16xf32>
    %21 = arith.addf %19, %20 : vector<2x16xf32>
    %cst_37 = arith.constant 0.000000e+00 : f32
    %22 = vector.broadcast %cst_37 : f32 to vector<2x16xf32>
    %23 = arith.maximumf %21, %22 : vector<2x16xf32>
    %cst_38 = arith.constant dense<0.000000e+00> : vector<2x16xf32>
    %24 = tpu.matmul %23, %1, %cst_38 {dimension_numbers = #tpu.dot_dimension_numbers<[1], [0], [0], [1], [0, 0, 1, 1], [], []>} : vector<2x16xf32>, vector<16x16xf32>, vector<2x16xf32> -> vector<2x16xf32>
    %25 = vector.broadcast %4 : vector<1x16xf32> to vector<2x16xf32>
    %26 = arith.addf %24, %25 : vector<2x16xf32>
    %cst_39 = arith.constant 0.000000e+00 : f32
    %27 = vector.broadcast %cst_39 : f32 to vector<2x16xf32>
    %28 = arith.maximumf %26, %27 : vector<2x16xf32>
    %cst_40 = arith.constant dense<0.000000e+00> : vector<2x8xf32>
    %29 = tpu.matmul %28, %2, %cst_40 {dimension_numbers = #tpu.dot_dimension_numbers<[1], [0], [0], [1], [0, 0, 1, 1], [], []>} : vector<2x16xf32>, vector<16x8xf32>, vector<2x8xf32> -> vector<2x8xf32>
    %30 = vector.broadcast %5 : vector<1x8xf32> to vector<2x8xf32>
    %31 = arith.addf %29, %30 : vector<2x8xf32>
    %cst_41 = arith.constant 0.000000e+00 : f32
    %32 = vector.broadcast %cst_41 : f32 to vector<2x8xf32>
    %33 = arith.maximumf %31, %32 : vector<2x8xf32>
    %cst_42 = arith.constant dense<0.000000e+00> : vector<2x16xf32>
    %34 = tpu.matmul %33, %6, %cst_42 {dimension_numbers = #tpu.dot_dimension_numbers<[1], [0], [0], [1], [0, 0, 1, 1], [], []>} : vector<2x8xf32>, vector<8x16xf32>, vector<2x16xf32> -> vector<2x16xf32>
    %35 = vector.broadcast %9 : vector<1x16xf32> to vector<2x16xf32>
    %36 = arith.addf %34, %35 : vector<2x16xf32>
    %cst_43 = arith.constant 0.000000e+00 : f32
    %37 = vector.broadcast %cst_43 : f32 to vector<2x16xf32>
    %38 = arith.maximumf %36, %37 : vector<2x16xf32>
    %cst_44 = arith.constant dense<0.000000e+00> : vector<2x16xf32>
    %39 = tpu.matmul %38, %7, %cst_44 {dimension_numbers = #tpu.dot_dimension_numbers<[1], [0], [0], [1], [0, 0, 1, 1], [], []>} : vector<2x16xf32>, vector<16x16xf32>, vector<2x16xf32> -> vector<2x16xf32>
    %40 = vector.broadcast %10 : vector<1x16xf32> to vector<2x16xf32>
    %41 = arith.addf %39, %40 : vector<2x16xf32>
    %cst_45 = arith.constant 0.000000e+00 : f32
    %42 = vector.broadcast %cst_45 : f32 to vector<2x16xf32>
    %43 = arith.maximumf %41, %42 : vector<2x16xf32>
    %cst_46 = arith.constant dense<0.000000e+00> : vector<2x32xf32>
    %44 = tpu.matmul %43, %8, %cst_46 {dimension_numbers = #tpu.dot_dimension_numbers<[1], [0], [0], [1], [0, 0, 1, 1], [], []>} : vector<2x16xf32>, vector<16x32xf32>, vector<2x32xf32> -> vector<2x32xf32>
    %45 = vector.broadcast %11 : vector<1x32xf32> to vector<2x32xf32>
    %46 = arith.addf %44, %45 : vector<2x32xf32>
    %47 = arith.negf %46 : vector<2x32xf32>
    %48 = math.exp %47 : vector<2x32xf32>
    %cst_47 = arith.constant 1.000000e+00 : f32
    %49 = vector.broadcast %cst_47 : f32 to vector<2x32xf32>
    %50 = arith.addf %49, %48 : vector<2x32xf32>
    %51 = arith.divf %49, %50 : vector<2x32xf32>
    %52 = arith.truncf %51 : vector<2x32xf32> to vector<2x32xbf16>
    %c0_48 = arith.constant 0 : index
    %c0_49 = arith.constant 0 : index
    %53 = vector.load %arg20[%c0_48, %c0_49] : memref<2x32xbf16, #tpu.memory_space<vmem>>, vector<2x32xbf16>
    tpu.vector_store %arg20[%c0_48, %c0_49], %52 {strides = array<i32>} : memref<2x32xbf16, #tpu.memory_space<vmem>>, vector<2x32xbf16>,
    %cst_50 = arith.constant dense<0.000000e+00> : vector<2x16xf32>
    %54 = tpu.matmul %33, %12, %cst_50 {dimension_numbers = #tpu.dot_dimension_numbers<[1], [0], [0], [1], [0, 0, 1, 1], [], []>} : vector<2x8xf32>, vector<8x16xf32>, vector<2x16xf32> -> vector<2x16xf32>
    %55 = vector.broadcast %15 : vector<1x16xf32> to vector<2x16xf32>
    %56 = arith.addf %54, %55 : vector<2x16xf32>
    %cst_51 = arith.constant 0.000000e+00 : f32
    %57 = vector.broadcast %cst_51 : f32 to vector<2x16xf32>
    %58 = arith.maximumf %56, %57 : vector<2x16xf32>
    %cst_52 = arith.constant dense<0.000000e+00> : vector<2x16xf32>
    %59 = tpu.matmul %58, %13, %cst_52 {dimension_numbers = #tpu.dot_dimension_numbers<[1], [0], [0], [1], [0, 0, 1, 1], [], []>} : vector<2x16xf32>, vector<16x16xf32>, vector<2x16xf32> -> vector<2x16xf32>
    %60 = vector.broadcast %16 : vector<1x16xf32> to vector<2x16xf32>
    %61 = arith.addf %59, %60 : vector<2x16xf32>
    %cst_53 = arith.constant 0.000000e+00 : f32
    %62 = vector.broadcast %cst_53 : f32 to vector<2x16xf32>
    %63 = arith.maximumf %61, %62 : vector<2x16xf32>
    %cst_54 = arith.constant dense<0.000000e+00> : vector<2x32xf32>
    %64 = tpu.matmul %63, %14, %cst_54 {dimension_numbers = #tpu.dot_dimension_numbers<[1], [0], [0], [1], [0, 0, 1, 1], [], []>} : vector<2x16xf32>, vector<16x32xf32>, vector<2x32xf32> -> vector<2x32xf32>
    %65 = vector.broadcast %17 : vector<1x32xf32> to vector<2x32xf32>
    %66 = arith.addf %64, %65 : vector<2x32xf32>
    %67 = arith.negf %66 : vector<2x32xf32>
    %68 = math.exp %67 : vector<2x32xf32>
    %cst_55 = arith.constant 1.000000e+00 : f32
    %69 = vector.broadcast %cst_55 : f32 to vector<2x32xf32>
    %70 = arith.addf %69, %68 : vector<2x32xf32>
    %71 = arith.divf %69, %70 : vector<2x32xf32>
    %72 = arith.truncf %71 : vector<2x32xf32> to vector<2x32xbf16>
    %c0_56 = arith.constant 0 : index
    %c0_57 = arith.constant 0 : index
    %73 = vector.load %arg21[%c0_56, %c0_57] : memref<2x32xbf16, #tpu.memory_space<vmem>>, vector<2x32xbf16>
    tpu.vector_store %arg21[%c0_56, %c0_57], %72 {strides = array<i32>} : memref<2x32xbf16, #tpu.memory_space<vmem>>, vector<2x32xbf16>,
    %cst_58 = arith.constant dense<0.000000e+00> : vector<2x16xf32>
    %74 = tpu.matmul %51, %0, %cst_58 {dimension_numbers = #tpu.dot_dimension_numbers<[1], [0], [0], [1], [0, 0, 1, 1], [], []>} : vector<2x32xf32>, vector<32x16xf32>, vector<2x16xf32> -> vector<2x16xf32>
    %75 = vector.broadcast %3 : vector<1x16xf32> to vector<2x16xf32>
    %76 = arith.addf %74, %75 : vector<2x16xf32>
    %cst_59 = arith.constant 0.000000e+00 : f32
    %77 = vector.broadcast %cst_59 : f32 to vector<2x16xf32>
    %78 = arith.maximumf %76, %77 : vector<2x16xf32>
    %cst_60 = arith.constant dense<0.000000e+00> : vector<2x16xf32>
    %79 = tpu.matmul %78, %1, %cst_60 {dimension_numbers = #tpu.dot_dimension_numbers<[1], [0], [0], [1], [0, 0, 1, 1], [], []>} : vector<2x16xf32>, vector<16x16xf32>, vector<2x16xf32> -> vector<2x16xf32>
    %80 = vector.broadcast %4 : vector<1x16xf32> to vector<2x16xf32>
    %81 = arith.addf %79, %80 : vector<2x16xf32>
    %cst_61 = arith.constant 0.000000e+00 : f32
    %82 = vector.broadcast %cst_61 : f32 to vector<2x16xf32>
    %83 = arith.maximumf %81, %82 : vector<2x16xf32>
    %cst_62 = arith.constant dense<0.000000e+00> : vector<2x8xf32>
    %84 = tpu.matmul %83, %2, %cst_62 {dimension_numbers = #tpu.dot_dimension_numbers<[1], [0], [0], [1], [0, 0, 1, 1], [], []>} : vector<2x16xf32>, vector<16x8xf32>, vector<2x8xf32> -> vector<2x8xf32>
    %85 = vector.broadcast %5 : vector<1x8xf32> to vector<2x8xf32>
    %86 = arith.addf %84, %85 : vector<2x8xf32>
    %cst_63 = arith.constant 0.000000e+00 : f32
    %87 = vector.broadcast %cst_63 : f32 to vector<2x8xf32>
    %88 = arith.maximumf %86, %87 : vector<2x8xf32>
    %cst_64 = arith.constant dense<0.000000e+00> : vector<2x16xf32>
    %89 = tpu.matmul %88, %12, %cst_64 {dimension_numbers = #tpu.dot_dimension_numbers<[1], [0], [0], [1], [0, 0, 1, 1], [], []>} : vector<2x8xf32>, vector<8x16xf32>, vector<2x16xf32> -> vector<2x16xf32>
    %90 = vector.broadcast %15 : vector<1x16xf32> to vector<2x16xf32>
    %91 = arith.addf %89, %90 : vector<2x16xf32>
    %cst_65 = arith.constant 0.000000e+00 : f32
    %92 = vector.broadcast %cst_65 : f32 to vector<2x16xf32>
    %93 = arith.maximumf %91, %92 : vector<2x16xf32>
    %cst_66 = arith.constant dense<0.000000e+00> : vector<2x16xf32>
    %94 = tpu.matmul %93, %13, %cst_66 {dimension_numbers = #tpu.dot_dimension_numbers<[1], [0], [0], [1], [0, 0, 1, 1], [], []>} : vector<2x16xf32>, vector<16x16xf32>, vector<2x16xf32> -> vector<2x16xf32>
    %95 = vector.broadcast %16 : vector<1x16xf32> to vector<2x16xf32>
    %96 = arith.addf %94, %95 : vector<2x16xf32>
    %cst_67 = arith.constant 0.000000e+00 : f32
    %97 = vector.broadcast %cst_67 : f32 to vector<2x16xf32>
    %98 = arith.maximumf %96, %97 : vector<2x16xf32>
    %cst_68 = arith.constant dense<0.000000e+00> : vector<2x32xf32>
    %99 = tpu.matmul %98, %14, %cst_68 {dimension_numbers = #tpu.dot_dimension_numbers<[1], [0], [0], [1], [0, 0, 1, 1], [], []>} : vector<2x16xf32>, vector<16x32xf32>, vector<2x32xf32> -> vector<2x32xf32>
    %100 = vector.broadcast %17 : vector<1x32xf32> to vector<2x32xf32>
    %101 = arith.addf %99, %100 : vector<2x32xf32>
    %102 = arith.negf %101 : vector<2x32xf32>
    %103 = math.exp %102 : vector<2x32xf32>
    %cst_69 = arith.constant 1.000000e+00 : f32
    %104 = vector.broadcast %cst_69 : f32 to vector<2x32xf32>
    %105 = arith.addf %104, %103 : vector<2x32xf32>
    %106 = arith.divf %104, %105 : vector<2x32xf32>
    %107 = arith.truncf %106 : vector<2x32xf32> to vector<2x32xbf16>
    %c0_70 = arith.constant 0 : index
    %c0_71 = arith.constant 0 : index
    %108 = vector.load %arg22[%c0_70, %c0_71] : memref<2x32xbf16, #tpu.memory_space<vmem>>, vector<2x32xbf16>
    tpu.vector_store %arg22[%c0_70, %c0_71], %107 {strides = array<i32>} : memref<2x32xbf16, #tpu.memory_space<vmem>>, vector<2x32xbf16>,
    return
  }
  func.func @transform_0(%arg0: i32) -> (i32, i32) {
    %c0_i32 = arith.constant 0 : i32
    %c0_i32_0 = arith.constant 0 : i32
    return %arg0, %c0_i32 : i32, i32
  }
  func.func @transform_1(%arg0: i32) -> (i32, i32) {
    %c0_i32 = arith.constant 0 : i32
    %c0_i32_0 = arith.constant 0 : i32
    %c0_i32_1 = arith.constant 0 : i32
    return %c0_i32, %c0_i32_0 : i32, i32
  }
  func.func @transform_2(%arg0: i32) -> (i32, i32) {
    %c0_i32 = arith.constant 0 : i32
    %c0_i32_0 = arith.constant 0 : i32
    %c0_i32_1 = arith.constant 0 : i32
    return %c0_i32, %c0_i32_0 : i32, i32
  }
  func.func @transform_3(%arg0: i32) -> (i32, i32) {
    %c0_i32 = arith.constant 0 : i32
    %c0_i32_0 = arith.constant 0 : i32
    %c0_i32_1 = arith.constant 0 : i32
    return %c0_i32, %c0_i32_0 : i32, i32
  }
  func.func @transform_4(%arg0: i32) -> (i32, i32) {
    %c0_i32 = arith.constant 0 : i32
    %c0_i32_0 = arith.constant 0 : i32
    %c0_i32_1 = arith.constant 0 : i32
    return %c0_i32, %c0_i32_0 : i32, i32
  }
  func.func @transform_5(%arg0: i32) -> (i32, i32) {
    %c0_i32 = arith.constant 0 : i32
    %c0_i32_0 = arith.constant 0 : i32
    %c0_i32_1 = arith.constant 0 : i32
    return %c0_i32, %c0_i32_0 : i32, i32
  }
  func.func @transform_6(%arg0: i32) -> (i32, i32) {
    %c0_i32 = arith.constant 0 : i32
    %c0_i32_0 = arith.constant 0 : i32
    %c0_i32_1 = arith.constant 0 : i32
    return %c0_i32, %c0_i32_0 : i32, i32
  }
  func.func @transform_7(%arg0: i32) -> (i32, i32) {
    %c0_i32 = arith.constant 0 : i32
    %c0_i32_0 = arith.constant 0 : i32
    %c0_i32_1 = arith.constant 0 : i32
    return %c0_i32, %c0_i32_0 : i32, i32
  }
  func.func @transform_8(%arg0: i32) -> (i32, i32) {
    %c0_i32 = arith.constant 0 : i32
    %c0_i32_0 = arith.constant 0 : i32
    %c0_i32_1 = arith.constant 0 : i32
    return %c0_i32, %c0_i32_0 : i32, i32
  }
  func.func @transform_9(%arg0: i32) -> (i32, i32) {
    %c0_i32 = arith.constant 0 : i32
    %c0_i32_0 = arith.constant 0 : i32
    %c0_i32_1 = arith.constant 0 : i32
    return %c0_i32, %c0_i32_0 : i32, i32
  }
  func.func @transform_10(%arg0: i32) -> (i32, i32) {
    %c0_i32 = arith.constant 0 : i32
    %c0_i32_0 = arith.constant 0 : i32
    %c0_i32_1 = arith.constant 0 : i32
    return %c0_i32, %c0_i32_0 : i32, i32
  }
  func.func @transform_11(%arg0: i32) -> (i32, i32) {
    %c0_i32 = arith.constant 0 : i32
    %c0_i32_0 = arith.constant 0 : i32
    %c0_i32_1 = arith.constant 0 : i32
    return %c0_i32, %c0_i32_0 : i32, i32
  }
  func.func @transform_12(%arg0: i32) -> (i32, i32) {
    %c0_i32 = arith.constant 0 : i32
    %c0_i32_0 = arith.constant 0 : i32
    %c0_i32_1 = arith.constant 0 : i32
    return %c0_i32, %c0_i32_0 : i32, i32
  }
  func.func @transform_13(%arg0: i32) -> (i32, i32) {
    %c0_i32 = arith.constant 0 : i32
    %c0_i32_0 = arith.constant 0 : i32
    %c0_i32_1 = arith.constant 0 : i32
    return %c0_i32, %c0_i32_0 : i32, i32
  }
  func.func @transform_14(%arg0: i32) -> (i32, i32) {
    %c0_i32 = arith.constant 0 : i32
    %c0_i32_0 = arith.constant 0 : i32
    %c0_i32_1 = arith.constant 0 : i32
    return %c0_i32, %c0_i32_0 : i32, i32
  }
  func.func @transform_15(%arg0: i32) -> (i32, i32) {
    %c0_i32 = arith.constant 0 : i32
    %c0_i32_0 = arith.constant 0 : i32
    %c0_i32_1 = arith.constant 0 : i32
    return %c0_i32, %c0_i32_0 : i32, i32
  }
  func.func @transform_16(%arg0: i32) -> (i32, i32) {
    %c0_i32 = arith.constant 0 : i32
    %c0_i32_0 = arith.constant 0 : i32
    %c0_i32_1 = arith.constant 0 : i32
    return %c0_i32, %c0_i32_0 : i32, i32
  }
  func.func @transform_17(%arg0: i32) -> (i32, i32) {
    %c0_i32 = arith.constant 0 : i32
    %c0_i32_0 = arith.constant 0 : i32
    %c0_i32_1 = arith.constant 0 : i32
    return %c0_i32, %c0_i32_0 : i32, i32
  }
  func.func @transform_18(%arg0: i32) -> (i32, i32) {
    %c0_i32 = arith.constant 0 : i32
    %c0_i32_0 = arith.constant 0 : i32
    %c0_i32_1 = arith.constant 0 : i32
    return %c0_i32, %c0_i32_0 : i32, i32
  }
  func.func @transform_19(%arg0: i32) -> (i32, i32) {
    %c0_i32 = arith.constant 0 : i32
    %c0_i32_0 = arith.constant 0 : i32
    return %arg0, %c0_i32 : i32, i32
  }
  func.func @transform_20(%arg0: i32) -> (i32, i32) {
    %c0_i32 = arith.constant 0 : i32
    %c0_i32_0 = arith.constant 0 : i32
    return %arg0, %c0_i32 : i32, i32
  }
  func.func @transform_21(%arg0: i32) -> (i32, i32) {
    %c0_i32 = arith.constant 0 : i32
    %c0_i32_0 = arith.constant 0 : i32
    return %arg0, %c0_i32 : i32, i32
  }
}

</mosaic_0001>

<llo_original>
// kernel: tpu_custom_call.1
$region0: #{tpu_custom_call.1}
  #allocation0 [shape = 'u32[]', space=smem, size = 0x4, offset = 0x4, fixed_abs, tag = 'smem constant byte address 0x4 - core index']
  #allocation1 [shape = 'u32[72,128]{1,0:T(1,128)}', space=vmem, size = 0x9000, scoped, tag = 'internal scratch']
  %s0 = inlined_call_operand.hbm [shape: f32[2,32], index: 0, kind: input, shape index: {}]
  %s1 = inlined_call_operand.vmem [shape: f32[32,16], index: 1, kind: input, shape index: {}]
  %s2 = inlined_call_operand.hbm [shape: f32[1,16], index: 2, kind: input, shape index: {}]
  %s3 = inlined_call_operand.vmem [shape: f32[16,16], index: 3, kind: input, shape index: {}]
  %s4 = inlined_call_operand.hbm [shape: f32[1,16], index: 4, kind: input, shape index: {}]
  %s5 = inlined_call_operand.vmem [shape: f32[16,8], index: 5, kind: input, shape index: {}]
  %s6 = inlined_call_operand.hbm [shape: f32[1,8], index: 6, kind: input, shape index: {}]
  %s7 = inlined_call_operand.hbm [shape: f32[8,16], index: 7, kind: input, shape index: {}]
  %s8 = inlined_call_operand.hbm [shape: f32[1,16], index: 8, kind: input, shape index: {}]
  %s9 = inlined_call_operand.vmem [shape: f32[16,16], index: 9, kind: input, shape index: {}]
  %s10 = inlined_call_operand.vmem [shape: f32[1,16], index: 10, kind: input, shape index: {}]
  %s11 = inlined_call_operand.vmem [shape: f32[16,32], index: 11, kind: input, shape index: {}]
  %s12 = inlined_call_operand.vmem [shape: f32[1,32], index: 12, kind: input, shape index: {}]
  %s13 = inlined_call_operand.hbm [shape: f32[8,16], index: 13, kind: input, shape index: {}]
  %s14 = inlined_call_operand.vmem [shape: f32[1,16], index: 14, kind: input, shape index: {}]
  %s15 = inlined_call_operand.vmem [shape: f32[16,16], index: 15, kind: input, shape index: {}]
  %s16 = inlined_call_operand.vmem [shape: f32[1,16], index: 16, kind: input, shape index: {}]
  %s17 = inlined_call_operand.hbm [shape: f32[16,32], index: 17, kind: input, shape index: {}]
  %s18 = inlined_call_operand.vmem [shape: f32[1,32], index: 18, kind: input, shape index: {}]
  %s19 = inlined_call_operand.hbm [shape: bf16[2,32], index: 19, kind: output, shape index: {0}]
  %s20 = inlined_call_operand.hbm [shape: bf16[2,32], index: 20, kind: output, shape index: {1}]
  %s21 = inlined_call_operand.hbm [shape: bf16[2,32], index: 21, kind: output, shape index: {2}]
  %22 = xla_tuple %s19, %s20, %s21
  %s23 = sld [smem:[#allocation0]]
  $region134: #{tpu_custom_call.1} parent=0
    _
  %s25 = ssub.s32 1, %s23
  %s26 = scalar_select 0, %s25, %s23
  $region1: #{tpu_custom_call.1} parent=0
    #allocation2 [shape = 'u8[1024]{0}', space=vmem, size = 0x400, scoped, tag = 'input window, operand 0, single buffered']
    #allocation3 [shape = 's32[1]{0}', space=sflag, size = 0x4, scoped, tag = 'scoped memory for tpu_custom_call.1']
    #allocation4 [shape = 's32[1]{0}', space=sflag, size = 0x4, scoped, tag = 'scoped memory for tpu_custom_call.1']
    #allocation5 [shape = 'u8[512]{0}', space=vmem, size = 0x400, scoped, tag = 'input window, operand 2, single buffered']
    #allocation6 [shape = 's32[1]{0}', space=sflag, size = 0x4, scoped, tag = 'scoped memory for tpu_custom_call.1']
    #allocation7 [shape = 'u8[512]{0}', space=vmem, size = 0x400, scoped, tag = 'input window, operand 4, single buffered']
    #allocation8 [shape = 'u8[512]{0}', space=vmem, size = 0x400, scoped, tag = 'input window, operand 6, single buffered']
    #allocation9 [shape = 's32[1]{0}', space=sflag, size = 0x4, scoped, tag = 'scoped memory for tpu_custom_call.1']
    #allocation10 [shape = 'u8[4096]{0}', space=vmem, size = 0x1000, scoped, tag = 'input window, operand 7, single buffered']
    #allocation11 [shape = 'u8[512]{0}', space=vmem, size = 0x400, scoped, tag = 'input window, operand 8, single buffered']
    #allocation12 [shape = 's32[1]{0}', space=sflag, size = 0x4, scoped, tag = 'scoped memory for tpu_custom_call.1']
    #allocation13 [shape = 'u8[4096]{0}', space=vmem, size = 0x1000, scoped, tag = 'input window, operand 13, single buffered']
    #allocation14 [shape = 'u8[8192]{0}', space=vmem, size = 0x2000, scoped, tag = 'input window, operand 17, single buffered']
    #allocation15 [shape = 's32[1]{0}', space=sflag, size = 0x4, scoped, tag = 'scoped memory for tpu_custom_call.1']
    #allocation16 [shape = 'u8[512]{0}', space=vmem, size = 0x400, scoped, tag = 'output window, operand 0, single buffered']
    #allocation17 [shape = 'u8[512]{0}', space=vmem, size = 0x400, scoped, tag = 'output window, operand 1, single buffered']
    #allocation18 [shape = 's32[1]{0}', space=sflag, size = 0x4, scoped, tag = 'scoped memory for tpu_custom_call.1']
    #allocation19 [shape = 'u8[512]{0}', space=vmem, size = 0x400, scoped, tag = 'output window, operand 2, single buffered']
    %27 = vsyncpa [#allocation3], 0
    %28 = vsyncpa [#allocation6], 0
    %29 = vsyncpa [#allocation9], 0
    %30 = vsyncpa [#allocation12], 0
    %31 = vsyncpa [#allocation15], 0
    %32 = vsyncpa [#allocation4], 0
    %33 = vsyncpa [#allocation18], 0
    // Predicated region
    $region2: #{tpu_custom_call.1} parent=1 // pred_check
      _
    $region3: #{tpu_custom_call.1} parent=1 // pred_check_branch
      %35 = sbr.rel (0) target = $region5
    $region4: #{tpu_custom_call.1} parent=1 // pred_region
      %37 = vsyncadd [#allocation3], 0
      %s39 = sshll.u32 %s0, 4
      %s40 = int_to_ptr.hbm [resolvable:$true] %s39
      %s41 = sshll.u32 [#allocation2], 4
      %s42 = int_to_ptr.vmem [resolvable:$true] %s41
      %44 = dma.hbm_to_vmem [thread:$0]  %s40, 32, %s42, [#allocation3]
    $region5: #{tpu_custom_call.1} parent=1 // pred_fallthru
      _
    // Predicated region
    $region6: #{tpu_custom_call.1} parent=1 // pred_check
      _
    $region7: #{tpu_custom_call.1} parent=1 // pred_check_branch
      %46 = sbr.rel (0) target = $region9
    $region8: #{tpu_custom_call.1} parent=1 // pred_region
      _
    $region9: #{tpu_custom_call.1} parent=1 // pred_fallthru
      _
    // Predicated region
    $region10: #{tpu_custom_call.1} parent=1 // pred_check
      _
    $region11: #{tpu_custom_call.1} parent=1 // pred_check_branch
      %48 = sbr.rel (0) target = $region13
    $region12: #{tpu_custom_call.1} parent=1 // pred_region
      %50 = vsyncadd [#allocation6], 0
      %s52 = sshll.u32 %s2, 4
      %s53 = int_to_ptr.hbm [resolvable:$true] %s52
      %s54 = sshll.u32 [#allocation5], 4
      %s55 = int_to_ptr.vmem [resolvable:$true] %s54
      %57 = dma.hbm_to_vmem [thread:$0]  %s53, 16, %s55, [#allocation6]
    $region13: #{tpu_custom_call.1} parent=1 // pred_fallthru
      _
    // Predicated region
    $region14: #{tpu_custom_call.1} parent=1 // pred_check
      _
    $region15: #{tpu_custom_call.1} parent=1 // pred_check_branch
      %59 = sbr.rel (0) target = $region17
    $region16: #{tpu_custom_call.1} parent=1 // pred_region
      _
    $region17: #{tpu_custom_call.1} parent=1 // pred_fallthru
      _
    // Predicated region
    $region18: #{tpu_custom_call.1} parent=1 // pred_check
      _
    $region19: #{tpu_custom_call.1} parent=1 // pred_check_branch
      %61 = sbr.rel (0) target = $region21
    $region20: #{tpu_custom_call.1} parent=1 // pred_region
      %63 = vsyncadd [#allocation6], 0
      %s65 = sshll.u32 %s4, 4
      %s66 = int_to_ptr.hbm [resolvable:$true] %s65
      %s67 = sshll.u32 [#allocation7], 4
      %s68 = int_to_ptr.vmem [resolvable:$true] %s67
      %70 = dma.hbm_to_vmem [thread:$0]  %s66, 16, %s68, [#allocation6]
    $region21: #{tpu_custom_call.1} parent=1 // pred_fallthru
      _
    // Predicated region
    $region22: #{tpu_custom_call.1} parent=1 // pred_check
      _
    $region23: #{tpu_custom_call.1} parent=1 // pred_check_branch
      %72 = sbr.rel (0) target = $region25
    $region24: #{tpu_custom_call.1} parent=1 // pred_region
      _
    $region25: #{tpu_custom_call.1} parent=1 // pred_fallthru
      _
    // Predicated region
    $region26: #{tpu_custom_call.1} parent=1 // pred_check
      _
    $region27: #{tpu_custom_call.1} parent=1 // pred_check_branch
      %74 = sbr.rel (0) target = $region29
    $region28: #{tpu_custom_call.1} parent=1 // pred_region
      %76 = vsyncadd [#allocation9], 0
      %s78 = sshll.u32 %s6, 4
      %s79 = int_to_ptr.hbm [resolvable:$true] %s78
      %s80 = sshll.u32 [#allocation8], 4
      %s81 = int_to_ptr.vmem [resolvable:$true] %s80
      %83 = dma.hbm_to_vmem [thread:$0]  %s79, 16, %s81, [#allocation9]
    $region29: #{tpu_custom_call.1} parent=1 // pred_fallthru
      _
    // Predicated region
    $region30: #{tpu_custom_call.1} parent=1 // pred_check
      _
    $region31: #{tpu_custom_call.1} parent=1 // pred_check_branch
      %85 = sbr.rel (0) target = $region33
    $region32: #{tpu_custom_call.1} parent=1 // pred_region
      %87 = vsyncadd [#allocation9], 0
      %s89 = sshll.u32 %s7, 4
      %s90 = int_to_ptr.hbm [resolvable:$true] %s89
      %s91 = sshll.u32 [#allocation10], 4
      %s92 = int_to_ptr.vmem [resolvable:$true] %s91
      %94 = dma.hbm_to_vmem [thread:$0]  %s90, 128, %s92, [#allocation9]
    $region33: #{tpu_custom_call.1} parent=1 // pred_fallthru
      _
    // Predicated region
    $region34: #{tpu_custom_call.1} parent=1 // pred_check
      _
    $region35: #{tpu_custom_call.1} parent=1 // pred_check_branch
      %96 = sbr.rel (0) target = $region37
    $region36: #{tpu_custom_call.1} parent=1 // pred_region
      %98 = vsyncadd [#allocation12], 0
      %s100 = sshll.u32 %s8, 4
      %s101 = int_to_ptr.hbm [resolvable:$true] %s100
      %s102 = sshll.u32 [#allocation11], 4
      %s103 = int_to_ptr.vmem [resolvable:$true] %s102
      %105 = dma.hbm_to_vmem [thread:$0]  %s101, 16, %s103, [#allocation12]
    $region37: #{tpu_custom_call.1} parent=1 // pred_fallthru
      _
    // Predicated region
    $region38: #{tpu_custom_call.1} parent=1 // pred_check
      _
    $region39: #{tpu_custom_call.1} parent=1 // pred_check_branch
      %107 = sbr.rel (0) target = $region41
    $region40: #{tpu_custom_call.1} parent=1 // pred_region
      _
    $region41: #{tpu_custom_call.1} parent=1 // pred_fallthru
      _
    // Predicated region
    $region42: #{tpu_custom_call.1} parent=1 // pred_check
      _
    $region43: #{tpu_custom_call.1} parent=1 // pred_check_branch
      %109 = sbr.rel (0) target = $region45
    $region44: #{tpu_custom_call.1} parent=1 // pred_region
      _
    $region45: #{tpu_custom_call.1} parent=1 // pred_fallthru
      _
    // Predicated region
    $region46: #{tpu_custom_call.1} parent=1 // pred_check
      _
    $region47: #{tpu_custom_call.1} parent=1 // pred_check_branch
      %111 = sbr.rel (0) target = $region49
    $region48: #{tpu_custom_call.1} parent=1 // pred_region
      _
    $region49: #{tpu_custom_call.1} parent=1 // pred_fallthru
      _
    // Predicated region
    $region50: #{tpu_custom_call.1} parent=1 // pred_check
      _
    $region51: #{tpu_custom_call.1} parent=1 // pred_check_branch
      %113 = sbr.rel (0) target = $region53
    $region52: #{tpu_custom_call.1} parent=1 // pred_region
      _
    $region53: #{tpu_custom_call.1} parent=1 // pred_fallthru
      _
    // Predicated region
    $region54: #{tpu_custom_call.1} parent=1 // pred_check
      _
    $region55: #{tpu_custom_call.1} parent=1 // pred_check_branch
      %115 = sbr.rel (0) target = $region57
    $region56: #{tpu_custom_call.1} parent=1 // pred_region
      %117 = vsyncadd [#allocation12], 0
      %s119 = sshll.u32 %s13, 4
      %s120 = int_to_ptr.hbm [resolvable:$true] %s119
      %s121 = sshll.u32 [#allocation13], 4
      %s122 = int_to_ptr.vmem [resolvable:$true] %s121
      %124 = dma.hbm_to_vmem [thread:$0]  %s120, 128, %s122, [#allocation12]
    $region57: #{tpu_custom_call.1} parent=1 // pred_fallthru
      _
    // Predicated region
    $region58: #{tpu_custom_call.1} parent=1 // pred_check
      _
    $region59: #{tpu_custom_call.1} parent=1 // pred_check_branch
      %126 = sbr.rel (0) target = $region61
    $region60: #{tpu_custom_call.1} parent=1 // pred_region
      _
    $region61: #{tpu_custom_call.1} parent=1 // pred_fallthru
      _
    // Predicated region
    $region62: #{tpu_custom_call.1} parent=1 // pred_check
      _
    $region63: #{tpu_custom_call.1} parent=1 // pred_check_branch
      %128 = sbr.rel (0) target = $region65
    $region64: #{tpu_custom_call.1} parent=1 // pred_region
      _
    $region65: #{tpu_custom_call.1} parent=1 // pred_fallthru
      _
    // Predicated region
    $region66: #{tpu_custom_call.1} parent=1 // pred_check
      _
    $region67: #{tpu_custom_call.1} parent=1 // pred_check_branch
      %130 = sbr.rel (0) target = $region69
    $region68: #{tpu_custom_call.1} parent=1 // pred_region
      _
    $region69: #{tpu_custom_call.1} parent=1 // pred_fallthru
      _
    // Predicated region
    $region70: #{tpu_custom_call.1} parent=1 // pred_check
      _
    $region71: #{tpu_custom_call.1} parent=1 // pred_check_branch
      %132 = sbr.rel (0) target = $region73
    $region72: #{tpu_custom_call.1} parent=1 // pred_region
      %134 = vsyncadd [#allocation15], 0
      %s135 = sshll.u32 %s17, 4
      %s136 = int_to_ptr.hbm [resolvable:$true] %s135
      %s137 = sshll.u32 [#allocation14], 4
      %s138 = int_to_ptr.vmem [resolvable:$true] %s137
      %143 = dma.hbm_to_vmem [thread:$0]  %s136, 256, %s138, [#allocation15], 128, 128, 8
    $region73: #{tpu_custom_call.1} parent=1 // pred_fallthru
      _
    // Predicated region
    $region74: #{tpu_custom_call.1} parent=1 // pred_check
      _
    $region75: #{tpu_custom_call.1} parent=1 // pred_check_branch
      %145 = sbr.rel (0) target = $region77
    $region76: #{tpu_custom_call.1} parent=1 // pred_region
      _
    $region77: #{tpu_custom_call.1} parent=1 // pred_fallthru
      _
    // Predicated region
    $region78: #{tpu_custom_call.1} parent=1 // pred_check
      _
    $region79: #{tpu_custom_call.1} parent=1 // pred_check_branch
      %147 = sbr.rel (0) target = $region81
    $region80: #{tpu_custom_call.1} parent=1 // pred_region
      %149 = dma.done [#allocation3], 32
    $region81: #{tpu_custom_call.1} parent=1 // pred_fallthru
      _
    // Predicated region
    $region82: #{tpu_custom_call.1} parent=1 // pred_check
      _
    $region83: #{tpu_custom_call.1} parent=1 // pred_check_branch
      %151 = sbr.rel (0) target = $region85
    $region84: #{tpu_custom_call.1} parent=1 // pred_region
      %153 = dma.done [#allocation6], 16
    $region85: #{tpu_custom_call.1} parent=1 // pred_fallthru
      _
    // Predicated region
    $region86: #{tpu_custom_call.1} parent=1 // pred_check
      _
    $region87: #{tpu_custom_call.1} parent=1 // pred_check_branch
      %155 = sbr.rel (0) target = $region89
    $region88: #{tpu_custom_call.1} parent=1 // pred_region
      %157 = dma.done [#allocation6], 16
    $region89: #{tpu_custom_call.1} parent=1 // pred_fallthru
      _
    // Predicated region
    $region90: #{tpu_custom_call.1} parent=1 // pred_check
      _
    $region91: #{tpu_custom_call.1} parent=1 // pred_check_branch
      %159 = sbr.rel (0) target = $region93
    $region92: #{tpu_custom_call.1} parent=1 // pred_region
      %161 = dma.done [#allocation9], 16
    $region93: #{tpu_custom_call.1} parent=1 // pred_fallthru
      _
    // Predicated region
    $region94: #{tpu_custom_call.1} parent=1 // pred_check
      _
    $region95: #{tpu_custom_call.1} parent=1 // pred_check_branch
      %163 = sbr.rel (0) target = $region97
    $region96: #{tpu_custom_call.1} parent=1 // pred_region
      %165 = dma.done [#allocation9], 128
    $region97: #{tpu_custom_call.1} parent=1 // pred_fallthru
      _
    // Predicated region
    $region98: #{tpu_custom_call.1} parent=1 // pred_check
      _
    $region99: #{tpu_custom_call.1} parent=1 // pred_check_branch
      %167 = sbr.rel (0) target = $region101
    $region100: #{tpu_custom_call.1} parent=1 // pred_region
      %169 = dma.done [#allocation12], 16
    $region101: #{tpu_custom_call.1} parent=1 // pred_fallthru
      _
    // Predicated region
    $region102: #{tpu_custom_call.1} parent=1 // pred_check
      _
    $region103: #{tpu_custom_call.1} parent=1 // pred_check_branch
      %171 = sbr.rel (0) target = $region105
    $region104: #{tpu_custom_call.1} parent=1 // pred_region
      %173 = dma.done [#allocation12], 128
    $region105: #{tpu_custom_call.1} parent=1 // pred_fallthru
      _
    // Predicated region
    $region106: #{tpu_custom_call.1} parent=1 // pred_check
      _
    $region107: #{tpu_custom_call.1} parent=1 // pred_check_branch
      %175 = sbr.rel (0) target = $region109
    $region108: #{tpu_custom_call.1} parent=1 // pred_region
      %177 = dma.done [#allocation15], 256
    $region109: #{tpu_custom_call.1} parent=1 // pred_fallthru
      _
    %v178 = vld [vmem:[%s1] sm:$0xff]
    %v179 = vld [vmem:[%s1 + $0x8] sm:$0xff]
    %v180 = vld [vmem:[%s1 + $0x10] sm:$0xff]
    %v181 = vld [vmem:[%s1 + $0x18] sm:$0xff]
    %v182 = vld [vmem:[%s3] sm:$0xff]
    %v183 = vld [vmem:[%s3 + $0x8] sm:$0xff]
    %v184 = vld [vmem:[%s5] sm:$0xff]
    %v185 = vld [vmem:[%s5 + $0x8] sm:$0xff]
    %v186 = vld [vmem:[#allocation5] sm:$0x1]
    %v187 = vld [vmem:[#allocation7] sm:$0x1]
    %v188 = vld [vmem:[#allocation8] sm:$0x1]
    %v189 = vld [vmem:[#allocation10] sm:$0xff]
    %v190 = vld [vmem:[%s9] sm:$0xff]
    %v191 = vld [vmem:[%s9 + $0x8] sm:$0xff]
    %v192 = vld [vmem:[%s11] sm:$0xff]
    %v193 = vld [vmem:[%s11 + $0x8] sm:$0xff]
    %v194 = vld [vmem:[#allocation11] sm:$0x1]
    %v195 = vld [vmem:[%s10] sm:$0x1]
    %v196 = vld [vmem:[%s12] sm:$0x1]
    %v197 = vld [vmem:[#allocation13] sm:$0xff]
    %v198 = vld [vmem:[%s15] sm:$0xff]
    %v199 = vld [vmem:[%s15 + $0x8] sm:$0xff]
    %v200 = vld [vmem:[#allocation14] sm:$0xff]
    %v201 = vld [vmem:[#allocation14 + $0x8] sm:$0xff]
    %v202 = vld [vmem:[%s14] sm:$0x1]
    %v203 = vld [vmem:[%s16] sm:$0x1]
    %v204 = vld [vmem:[%s18] sm:$0x1]
    %v205 = vld [vmem:[#allocation2] sm:$0x3]
    %v207 = vperm.slane %v186, 0
    %vm209 = vcmask 261120
    %v211 = vsel %vm209, %v205, 0
    %213 = vmatpush.msra.mxu0 0.0
    %214 = vmatpush.msra.mxu0 0.0
    %215 = vmatpush.msra.mxu0 0.0
    %216 = vmatpush.msra.mxu0 0.0
    %217 = vmatpush.msra.mxu0 0.0
    %218 = vmatpush.msra.mxu0 0.0
    %219 = vmatpush.msra.mxu0 0.0
    %220 = vmatpush.msra.mxu0 0.0
    %221 = vmatpush.msra.mxu0 0.0
    %222 = vmatpush.msra.mxu0 0.0
    %223 = vmatpush.msra.mxu0 0.0
    %224 = vmatpush.msra.mxu0 0.0
    %225 = vmatpush.msra.mxu0 %v181
    %226 = vmatpush.msra.mxu0 %v180
    %227 = vmatpush.msra.mxu0 %v179
    %228 = vmatpush.msra.mxu0 %v178
    %229 = vmatmul.f32.gmra.mxu0 %v211
    %v230 = vpop.f32.mrf.mxu0
    %v231 = vadd.f32 %v207, %v230
    %232 = vdwg.mxu0
    %v233 = vmax.f32 %v231, 0.0
    %v235 = vperm.slane %v187, 0
    %vm237 = vcmask 130048
    %v239 = vsel %vm237, %v233, 0
    %241 = vmatpush.msra.mxu0 0.0
    %242 = vmatpush.msra.mxu0 0.0
    %243 = vmatpush.msra.mxu0 0.0
    %244 = vmatpush.msra.mxu0 0.0
    %245 = vmatpush.msra.mxu0 0.0
    %246 = vmatpush.msra.mxu0 0.0
    %247 = vmatpush.msra.mxu0 0.0
    %248 = vmatpush.msra.mxu0 0.0
    %249 = vmatpush.msra.mxu0 0.0
    %250 = vmatpush.msra.mxu0 0.0
    %251 = vmatpush.msra.mxu0 0.0
    %252 = vmatpush.msra.mxu0 0.0
    %253 = vmatpush.msra.mxu0 0.0
    %254 = vmatpush.msra.mxu0 0.0
    %255 = vmatpush.msra.mxu0 %v183
    %256 = vmatpush.msra.mxu0 %v182
    %257 = vmatmul.f32.gmra.mxu0 %v239
    %v258 = vpop.f32.mrf.mxu0
    %v259 = vadd.f32 %v235, %v258
    %260 = vdwg.mxu0
    %v261 = vmax.f32 %v259, 0.0
    %v263 = vperm.slane %v188, 0
    %v266 = vsel %vm237, %v261, 0
    %268 = vmatpush.msra.mxu0 0.0
    %269 = vmatpush.msra.mxu0 0.0
    %270 = vmatpush.msra.mxu0 0.0
    %271 = vmatpush.msra.mxu0 0.0
    %272 = vmatpush.msra.mxu0 0.0
    %273 = vmatpush.msra.mxu0 0.0
    %274 = vmatpush.msra.mxu0 0.0
    %275 = vmatpush.msra.mxu0 0.0
    %276 = vmatpush.msra.mxu0 0.0
    %277 = vmatpush.msra.mxu0 0.0
    %278 = vmatpush.msra.mxu0 0.0
    %279 = vmatpush.msra.mxu0 0.0
    %280 = vmatpush.msra.mxu0 0.0
    %281 = vmatpush.msra.mxu0 0.0
    %282 = vmatpush.msra.mxu0 %v185
    %283 = vmatpush.msra.mxu0 %v184
    %284 = vmatmul.f32.gmra.mxu0 %v266
    %v285 = vpop.f32.mrf.mxu0
    %v286 = vadd.f32 %v263, %v285
    %287 = vdwg.mxu0
    %v288 = vmax.f32 %v286, 0.0
    %v290 = vperm.slane %v194, 0
    %vm292 = vcmask 64512
    %v294 = vsel %vm292, %v288, 0
    %296 = vmatpush.msra.mxu0 0.0
    %297 = vmatpush.msra.mxu0 0.0
    %298 = vmatpush.msra.mxu0 0.0
    %299 = vmatpush.msra.mxu0 0.0
    %300 = vmatpush.msra.mxu0 0.0
    %301 = vmatpush.msra.mxu0 0.0
    %302 = vmatpush.msra.mxu0 0.0
    %303 = vmatpush.msra.mxu0 0.0
    %304 = vmatpush.msra.mxu0 0.0
    %305 = vmatpush.msra.mxu0 0.0
    %306 = vmatpush.msra.mxu0 0.0
    %307 = vmatpush.msra.mxu0 0.0
    %308 = vmatpush.msra.mxu0 0.0
    %309 = vmatpush.msra.mxu0 0.0
    %310 = vmatpush.msra.mxu0 0.0
    %311 = vmatpush.msra.mxu0 %v189
    %312 = vmatmul.f32.gmra.mxu0 %v294
    %v313 = vpop.f32.mrf.mxu0
    %v314 = vadd.f32 %v290, %v313
    %315 = vdwg.mxu0
    %v316 = vmax.f32 %v314, 0.0
    %v318 = vperm.slane %v195, 0
    %v321 = vsel %vm237, %v316, 0
    %323 = vmatpush.msra.mxu0 0.0
    %324 = vmatpush.msra.mxu0 0.0
    %325 = vmatpush.msra.mxu0 0.0
    %326 = vmatpush.msra.mxu0 0.0
    %327 = vmatpush.msra.mxu0 0.0
    %328 = vmatpush.msra.mxu0 0.0
    %329 = vmatpush.msra.mxu0 0.0
    %330 = vmatpush.msra.mxu0 0.0
    %331 = vmatpush.msra.mxu0 0.0
    %332 = vmatpush.msra.mxu0 0.0
    %333 = vmatpush.msra.mxu0 0.0
    %334 = vmatpush.msra.mxu0 0.0
    %335 = vmatpush.msra.mxu0 0.0
    %336 = vmatpush.msra.mxu0 0.0
    %337 = vmatpush.msra.mxu0 %v191
    %338 = vmatpush.msra.mxu0 %v190
    %339 = vmatmul.f32.gmra.mxu0 %v321
    %v340 = vpop.f32.mrf.mxu0
    %v341 = vadd.f32 %v318, %v340
    %342 = vdwg.mxu0
    %v343 = vmax.f32 %v341, 0.0
    %v345 = vperm.slane %v196, 0
    %v348 = vsel %vm237, %v343, 0
    %350 = vmatpush.msra.mxu0 0.0
    %351 = vmatpush.msra.mxu0 0.0
    %352 = vmatpush.msra.mxu0 0.0
    %353 = vmatpush.msra.mxu0 0.0
    %354 = vmatpush.msra.mxu0 0.0
    %355 = vmatpush.msra.mxu0 0.0
    %356 = vmatpush.msra.mxu0 0.0
    %357 = vmatpush.msra.mxu0 0.0
    %358 = vmatpush.msra.mxu0 0.0
    %359 = vmatpush.msra.mxu0 0.0
    %360 = vmatpush.msra.mxu0 0.0
    %361 = vmatpush.msra.mxu0 0.0
    %362 = vmatpush.msra.mxu0 0.0
    %363 = vmatpush.msra.mxu0 0.0
    %364 = vmatpush.msra.mxu0 %v193
    %365 = vmatpush.msra.mxu0 %v192
    %366 = vmatmul.f32.gmra.mxu0 %v348
    %v367 = vpop.f32.mrf.mxu0
    %v368 = vadd.f32 %v345, %v367
    %369 = vdwg.mxu0
    %v370 = vxor.u32 %v368, 2147483648
    %v371 = vmul.f32 %v370, 1.442695
    %v372 = vpow.pop %v371
    %v373 = vadd.f32 %v372, 1.0
    %v374 = vrcp.pop %v373
    %v375 = vmul.f32 %v373, %v374
    %v376 = vsub.f32 1.0, %v375
    %v377 = vmul.f32 %v374, %v376
    %v378 = vadd.f32 %v374, %v377
    %vm379 = vweird.f32 %v373
    %vm380 = vweird.f32 %v374
    %vm381 = vmor %vm379, %vm380
    %v382 = vsel %vm381, %v374, %v378
    %v383 = vand.u32 2147483647, %v373
    %vm384 = vcmp.eq.f32.partialorder %v383, 8.507059e+37
    %v385 = vand.u32 %v373, 2147483648
    %v386 = vor.u32 1.1754944e-38, %v385
    %v387 = vsel %vm384, %v386, %v382
    %v388 = vmul.f32 1.0, %v387
    %v389 = vpack.c.bf16 %v388, %v388
    %vm390 = vcmask 253952
    %391 = vst.msk [vmem:[#allocation16] sm:$0x1] %vm390, %v389
    %v393 = vperm.slane %v202, 0
    %395 = vmatpush.msra.mxu0 0.0
    %396 = vmatpush.msra.mxu0 0.0
    %397 = vmatpush.msra.mxu0 0.0
    %398 = vmatpush.msra.mxu0 0.0
    %399 = vmatpush.msra.mxu0 0.0
    %400 = vmatpush.msra.mxu0 0.0
    %401 = vmatpush.msra.mxu0 0.0
    %402 = vmatpush.msra.mxu0 0.0
    %403 = vmatpush.msra.mxu0 0.0
    %404 = vmatpush.msra.mxu0 0.0
    %405 = vmatpush.msra.mxu0 0.0
    %406 = vmatpush.msra.mxu0 0.0
    %407 = vmatpush.msra.mxu0 0.0
    %408 = vmatpush.msra.mxu0 0.0
    %409 = vmatpush.msra.mxu0 0.0
    %410 = vmatpush.msra.mxu0 %v197
    %411 = vmatmul.f32.gmra.mxu0 %v294
    %v412 = vpop.f32.mrf.mxu0
    %v413 = vadd.f32 %v393, %v412
    %414 = vdwg.mxu0
    %v415 = vmax.f32 %v413, 0.0
    %v417 = vperm.slane %v203, 0
    %v420 = vsel %vm237, %v415, 0
    %422 = vmatpush.msra.mxu0 0.0
    %423 = vmatpush.msra.mxu0 0.0
    %424 = vmatpush.msra.mxu0 0.0
    %425 = vmatpush.msra.mxu0 0.0
    %426 = vmatpush.msra.mxu0 0.0
    %427 = vmatpush.msra.mxu0 0.0
    %428 = vmatpush.msra.mxu0 0.0
    %429 = vmatpush.msra.mxu0 0.0
    %430 = vmatpush.msra.mxu0 0.0
    %431 = vmatpush.msra.mxu0 0.0
    %432 = vmatpush.msra.mxu0 0.0
    %433 = vmatpush.msra.mxu0 0.0
    %434 = vmatpush.msra.mxu0 0.0
    %435 = vmatpush.msra.mxu0 0.0
    %436 = vmatpush.msra.mxu0 %v199
    %437 = vmatpush.msra.mxu0 %v198
    %438 = vmatmul.f32.gmra.mxu0 %v420
    %v439 = vpop.f32.mrf.mxu0
    %v440 = vadd.f32 %v417, %v439
    %441 = vdwg.mxu0
    %v442 = vmax.f32 %v440, 0.0
    %v444 = vperm.slane %v204, 0
    %v447 = vsel %vm237, %v442, 0
    %449 = vmatpush.msra.mxu0 0.0
    %450 = vmatpush.msra.mxu0 0.0
    %451 = vmatpush.msra.mxu0 0.0
    %452 = vmatpush.msra.mxu0 0.0
    %453 = vmatpush.msra.mxu0 0.0
    %454 = vmatpush.msra.mxu0 0.0
    %455 = vmatpush.msra.mxu0 0.0
    %456 = vmatpush.msra.mxu0 0.0
    %457 = vmatpush.msra.mxu0 0.0
    %458 = vmatpush.msra.mxu0 0.0
    %459 = vmatpush.msra.mxu0 0.0
    %460 = vmatpush.msra.mxu0 0.0
    %461 = vmatpush.msra.mxu0 0.0
    %462 = vmatpush.msra.mxu0 0.0
    %463 = vmatpush.msra.mxu0 %v201
    %464 = vmatpush.msra.mxu0 %v200
    %465 = vmatmul.f32.gmra.mxu0 %v447
    %v466 = vpop.f32.mrf.mxu0
    %v467 = vadd.f32 %v444, %v466
    %468 = vdwg.mxu0
    %v469 = vxor.u32 %v467, 2147483648
    %v470 = vmul.f32 %v469, 1.442695
    %v471 = vpow.pop %v470
    %v472 = vadd.f32 %v471, 1.0
    %v473 = vrcp.pop %v472
    %v474 = vmul.f32 %v472, %v473
    %v475 = vsub.f32 1.0, %v474
    %v476 = vmul.f32 %v473, %v475
    %v477 = vadd.f32 %v473, %v476
    %vm478 = vweird.f32 %v472
    %vm479 = vweird.f32 %v473
    %vm480 = vmor %vm478, %vm479
    %v481 = vsel %vm480, %v473, %v477
    %v482 = vand.u32 2147483647, %v472
    %vm483 = vcmp.eq.f32.partialorder %v482, 8.507059e+37
    %v484 = vand.u32 %v472, 2147483648
    %v485 = vor.u32 1.1754944e-38, %v484
    %v486 = vsel %vm483, %v485, %v481
    %v487 = vmul.f32 1.0, %v486
    %v488 = vpack.c.bf16 %v487, %v487
    %489 = vst.msk [vmem:[#allocation17] sm:$0x1] %vm390, %v488
    %v491 = vsel %vm209, %v388, 0
    %493 = vmatpush.msra.mxu0 0.0
    %494 = vmatpush.msra.mxu0 0.0
    %495 = vmatpush.msra.mxu0 0.0
    %496 = vmatpush.msra.mxu0 0.0
    %497 = vmatpush.msra.mxu0 0.0
    %498 = vmatpush.msra.mxu0 0.0
    %499 = vmatpush.msra.mxu0 0.0
    %500 = vmatpush.msra.mxu0 0.0
    %501 = vmatpush.msra.mxu0 0.0
    %502 = vmatpush.msra.mxu0 0.0
    %503 = vmatpush.msra.mxu0 0.0
    %504 = vmatpush.msra.mxu0 0.0
    %505 = vmatpush.msra.mxu0 %v181
    %506 = vmatpush.msra.mxu0 %v180
    %507 = vmatpush.msra.mxu0 %v179
    %508 = vmatpush.msra.mxu0 %v178
    %509 = vmatmul.f32.gmra.mxu0 %v491
    %v510 = vpop.f32.mrf.mxu0
    %v511 = vadd.f32 %v207, %v510
    %512 = vdwg.mxu0
    %v513 = vmax.f32 %v511, 0.0
    %v515 = vsel %vm237, %v513, 0
    %517 = vmatpush.msra.mxu0 0.0
    %518 = vmatpush.msra.mxu0 0.0
    %519 = vmatpush.msra.mxu0 0.0
    %520 = vmatpush.msra.mxu0 0.0
    %521 = vmatpush.msra.mxu0 0.0
    %522 = vmatpush.msra.mxu0 0.0
    %523 = vmatpush.msra.mxu0 0.0
    %524 = vmatpush.msra.mxu0 0.0
    %525 = vmatpush.msra.mxu0 0.0
    %526 = vmatpush.msra.mxu0 0.0
    %527 = vmatpush.msra.mxu0 0.0
    %528 = vmatpush.msra.mxu0 0.0
    %529 = vmatpush.msra.mxu0 0.0
    %530 = vmatpush.msra.mxu0 0.0
    %531 = vmatpush.msra.mxu0 %v183
    %532 = vmatpush.msra.mxu0 %v182
    %533 = vmatmul.f32.gmra.mxu0 %v515
    %v534 = vpop.f32.mrf.mxu0
    %v535 = vadd.f32 %v235, %v534
    %536 = vdwg.mxu0
    %v537 = vmax.f32 %v535, 0.0
    %v539 = vsel %vm237, %v537, 0
    %541 = vmatpush.msra.mxu0 0.0
    %542 = vmatpush.msra.mxu0 0.0
    %543 = vmatpush.msra.mxu0 0.0
    %544 = vmatpush.msra.mxu0 0.0
    %545 = vmatpush.msra.mxu0 0.0
    %546 = vmatpush.msra.mxu0 0.0
    %547 = vmatpush.msra.mxu0 0.0
    %548 = vmatpush.msra.mxu0 0.0
    %549 = vmatpush.msra.mxu0 0.0
    %550 = vmatpush.msra.mxu0 0.0
    %551 = vmatpush.msra.mxu0 0.0
    %552 = vmatpush.msra.mxu0 0.0
    %553 = vmatpush.msra.mxu0 0.0
    %554 = vmatpush.msra.mxu0 0.0
    %555 = vmatpush.msra.mxu0 %v185
    %556 = vmatpush.msra.mxu0 %v184
    %557 = vmatmul.f32.gmra.mxu0 %v539
    %v558 = vpop.f32.mrf.mxu0
    %v559 = vadd.f32 %v263, %v558
    %560 = vdwg.mxu0
    %v561 = vmax.f32 %v559, 0.0
    %v563 = vsel %vm292, %v561, 0
    %565 = vmatpush.msra.mxu0 0.0
    %566 = vmatpush.msra.mxu0 0.0
    %567 = vmatpush.msra.mxu0 0.0
    %568 = vmatpush.msra.mxu0 0.0
    %569 = vmatpush.msra.mxu0 0.0
    %570 = vmatpush.msra.mxu0 0.0
    %571 = vmatpush.msra.mxu0 0.0
    %572 = vmatpush.msra.mxu0 0.0
    %573 = vmatpush.msra.mxu0 0.0
    %574 = vmatpush.msra.mxu0 0.0
    %575 = vmatpush.msra.mxu0 0.0
    %576 = vmatpush.msra.mxu0 0.0
    %577 = vmatpush.msra.mxu0 0.0
    %578 = vmatpush.msra.mxu0 0.0
    %579 = vmatpush.msra.mxu0 0.0
    %580 = vmatpush.msra.mxu0 %v197
    %581 = vmatmul.f32.gmra.mxu0 %v563
    %v582 = vpop.f32.mrf.mxu0
    %v583 = vadd.f32 %v393, %v582
    %584 = vdwg.mxu0
    %v585 = vmax.f32 %v583, 0.0
    %v587 = vsel %vm237, %v585, 0
    %589 = vmatpush.msra.mxu0 0.0
    %590 = vmatpush.msra.mxu0 0.0
    %591 = vmatpush.msra.mxu0 0.0
    %592 = vmatpush.msra.mxu0 0.0
    %593 = vmatpush.msra.mxu0 0.0
    %594 = vmatpush.msra.mxu0 0.0
    %595 = vmatpush.msra.mxu0 0.0
    %596 = vmatpush.msra.mxu0 0.0
    %597 = vmatpush.msra.mxu0 0.0
    %598 = vmatpush.msra.mxu0 0.0
    %599 = vmatpush.msra.mxu0 0.0
    %600 = vmatpush.msra.mxu0 0.0
    %601 = vmatpush.msra.mxu0 0.0
    %602 = vmatpush.msra.mxu0 0.0
    %603 = vmatpush.msra.mxu0 %v199
    %604 = vmatpush.msra.mxu0 %v198
    %605 = vmatmul.f32.gmra.mxu0 %v587
    %v606 = vpop.f32.mrf.mxu0
    %v607 = vadd.f32 %v417, %v606
    %608 = vdwg.mxu0
    %v609 = vmax.f32 %v607, 0.0
    %v611 = vsel %vm237, %v609, 0
    %613 = vmatpush.msra.mxu0 0.0
    %614 = vmatpush.msra.mxu0 0.0
    %615 = vmatpush.msra.mxu0 0.0
    %616 = vmatpush.msra.mxu0 0.0
    %617 = vmatpush.msra.mxu0 0.0
    %618 = vmatpush.msra.mxu0 0.0
    %619 = vmatpush.msra.mxu0 0.0
    %620 = vmatpush.msra.mxu0 0.0
    %621 = vmatpush.msra.mxu0 0.0
    %622 = vmatpush.msra.mxu0 0.0
    %623 = vmatpush.msra.mxu0 0.0
    %624 = vmatpush.msra.mxu0 0.0
    %625 = vmatpush.msra.mxu0 0.0
    %626 = vmatpush.msra.mxu0 0.0
    %627 = vmatpush.msra.mxu0 %v201
    %628 = vmatpush.msra.mxu0 %v200
    %629 = vmatmul.f32.gmra.mxu0 %v611
    %v630 = vpop.f32.mrf.mxu0
    %v631 = vadd.f32 %v444, %v630
    %632 = vdwg.mxu0
    %v633 = vxor.u32 %v631, 2147483648
    %v634 = vmul.f32 %v633, 1.442695
    %v635 = vpow.pop %v634
    %v636 = vadd.f32 %v635, 1.0
    %v637 = vrcp.pop %v636
    %v638 = vmul.f32 %v636, %v637
    %v639 = vsub.f32 1.0, %v638
    %v640 = vmul.f32 %v637, %v639
    %v641 = vadd.f32 %v637, %v640
    %vm642 = vweird.f32 %v636
    %vm643 = vweird.f32 %v637
    %vm644 = vmor %vm642, %vm643
    %v645 = vsel %vm644, %v637, %v641
    %v646 = vand.u32 2147483647, %v636
    %vm647 = vcmp.eq.f32.partialorder %v646, 8.507059e+37
    %v648 = vand.u32 %v636, 2147483648
    %v649 = vor.u32 1.1754944e-38, %v648
    %v650 = vsel %vm647, %v649, %v645
    %v651 = vmul.f32 1.0, %v650
    %v652 = vpack.c.bf16 %v651, %v651
    %653 = vst.msk [vmem:[#allocation19] sm:$0x1] %vm390, %v652
    // Predicated region
    $region110: #{tpu_custom_call.1} parent=1 // pred_check
      _
    $region111: #{tpu_custom_call.1} parent=1 // pred_check_branch
      %655 = sbr.rel (0) target = $region113
    $region112: #{tpu_custom_call.1} parent=1 // pred_region
      %657 = vsyncadd [#allocation4], 0
      %s659 = sshll.u32 [#allocation16], 4
      %s660 = int_to_ptr.vmem [resolvable:$true] %s659
      %s661 = sshll.u32 %s19, 4
      %s662 = int_to_ptr.hbm [resolvable:$true] %s661
      %664 = dma.vmem_to_hbm [thread:$0]  %s660, 16, %s662, [#allocation4]
    $region113: #{tpu_custom_call.1} parent=1 // pred_fallthru
      _
    // Predicated region
    $region114: #{tpu_custom_call.1} parent=1 // pred_check
      _
    $region115: #{tpu_custom_call.1} parent=1 // pred_check_branch
      %666 = sbr.rel (0) target = $region117
    $region116: #{tpu_custom_call.1} parent=1 // pred_region
      %668 = vsyncadd [#allocation18], 0
      %s670 = sshll.u32 [#allocation17], 4
      %s671 = int_to_ptr.vmem [resolvable:$true] %s670
      %s672 = sshll.u32 %s20, 4
      %s673 = int_to_ptr.hbm [resolvable:$true] %s672
      %675 = dma.vmem_to_hbm [thread:$0]  %s671, 16, %s673, [#allocation18]
    $region117: #{tpu_custom_call.1} parent=1 // pred_fallthru
      _
    // Predicated region
    $region118: #{tpu_custom_call.1} parent=1 // pred_check
      _
    $region119: #{tpu_custom_call.1} parent=1 // pred_check_branch
      %677 = sbr.rel (0) target = $region121
    $region120: #{tpu_custom_call.1} parent=1 // pred_region
      %679 = vsyncadd [#allocation18], 0
      %s681 = sshll.u32 [#allocation19], 4
      %s682 = int_to_ptr.vmem [resolvable:$true] %s681
      %s683 = sshll.u32 %s21, 4
      %s684 = int_to_ptr.hbm [resolvable:$true] %s683
      %686 = dma.vmem_to_hbm [thread:$0]  %s682, 16, %s684, [#allocation18]
    $region121: #{tpu_custom_call.1} parent=1 // pred_fallthru
      _
    // Predicated region
    $region122: #{tpu_custom_call.1} parent=1 // pred_check
      _
    $region123: #{tpu_custom_call.1} parent=1 // pred_check_branch
      %688 = sbr.rel (0) target = $region125
    $region124: #{tpu_custom_call.1} parent=1 // pred_region
      %690 = dma.done [#allocation4], 16
    $region125: #{tpu_custom_call.1} parent=1 // pred_fallthru
      _
    // Predicated region
    $region126: #{tpu_custom_call.1} parent=1 // pred_check
      _
    $region127: #{tpu_custom_call.1} parent=1 // pred_check_branch
      %692 = sbr.rel (0) target = $region129
    $region128: #{tpu_custom_call.1} parent=1 // pred_region
      %694 = dma.done [#allocation18], 16
    $region129: #{tpu_custom_call.1} parent=1 // pred_fallthru
      _
    // Predicated region
    $region130: #{tpu_custom_call.1} parent=1 // pred_check
      _
    $region131: #{tpu_custom_call.1} parent=1 // pred_check_branch
      %696 = sbr.rel (0) target = $region133
    $region132: #{tpu_custom_call.1} parent=1 // pred_region
      %698 = dma.done [#allocation18], 16
    $region133: #{tpu_custom_call.1} parent=1 // pred_fallthru
      _
    %699 = vsyncpa [#allocation3], 1
    %700 = vsyncpa [#allocation6], 1
    %701 = vsyncpa [#allocation9], 1
    %702 = vsyncpa [#allocation12], 1
    %703 = vsyncpa [#allocation15], 1
    %704 = vsyncpa [#allocation4], 1
    %705 = vsyncpa [#allocation18], 1

</llo_original>
